<compile_context>
chip_gen: v5e
topology: v5e:2x2
jax: 0.10.0
libtpu: 0.0.40
codegen_flags: <defaults>
</compile_context>

<pallas_src>
import functools

import jax
import jax.numpy as jnp
from jax import lax
from jax.experimental import pallas as pl
from jax.experimental.pallas import tpu as pltpu

EPS = 1e-6

# jnp versions of the FNS dict from the PyTorch file
FNS = {
    "sqrt": jnp.sqrt,
    "log": jnp.log,
    "log1": lambda x: jnp.log(x + 1.0),
    "linear": lambda x: x,
    "square": jnp.square,
    "disp": lambda x: 1.0 / x,
}


def _mse_tile_kernel(inp_ref, tgt_ref, mask_ref,          # inputs
                     num_ref, den_ref,                     # outputs (resident accumulators)
                     *, input_fn, is_linear_input, n_tokens, tile_n, needs_row_guard):
    nidx = pl.program_id(1)

    @pl.when(nidx == 0)
    def _init():
        num_ref[...] = jnp.zeros_like(num_ref)
        den_ref[...] = jnp.zeros_like(den_ref)

    # Hot path: elementwise error in f32 (inputs may be bf16/fp16 in HBM).
    x = inp_ref[0].astype(jnp.float32)                     # (TN, D)
    t = tgt_ref[0].astype(jnp.float32)                     # (TN, D)
    if is_linear_input:
        err = x - t                                        # eps cancels for identity fn
    else:
        eps = jnp.float32(EPS)
        err = input_fn(x + eps) - input_fn(t + eps)
    sq = err * err                                         # (TN, D)

    m = mask_ref[0]                                        # (TN, 1) float32

    if needs_row_guard:
        # Last tile may extend past N: padded rows hold garbage in both the data
        # and the mask buffers -> zero them with a validity predicate.
        row = nidx * tile_n + lax.broadcasted_iota(jnp.int32, (tile_n, 1), 0)
        valid = row < n_tokens                             # (TN, 1)
        m = jnp.where(valid, m, 0.0)
        contrib = jnp.where(valid, sq * m, 0.0)            # nan/garbage safe
    else:
        contrib = sq * m

    row_sums = jnp.sum(contrib, axis=-1, keepdims=True)    # (TN, 1) lane reduce over D
    num_partial = jnp.sum(row_sums, axis=0, keepdims=True)  # (1, 1)  sublane reduce over TN
    den_partial = jnp.sum(m, axis=0, keepdims=True)          # (1, 1)

    num_ref[0] = num_ref[0] + num_partial
    den_ref[0] = den_ref[0] + den_partial


def _choose_tile_n(N, D, in_itemsize, tgt_itemsize, budget_bytes=8 << 20):
    """Pick a token-tile size whose double-buffered VMEM footprint fits the budget."""
    lane = pl.cdiv(max(D, 1), 128) * 128                   # lane padding of the data blocks
    per_row = lane * (in_itemsize + tgt_itemsize) + 128 * 4  # + f32 mask row (lane padded)
    per_row *= 2                                           # double buffering
    tn = int(budget_bytes // per_row)
    tn = max((tn // 32) * 32, 32)                          # keep sublane tiling friendly
    if tn >= N:
        return N                                           # full-extent block is always legal
    return tn


class MSE:
    """Pallas-TPU implementation of UniDepth's MSE loss forward."""

    def __init__(self, weight: float = 1.0, input_fn: str = "linear",
                 output_fn: str = "linear"):
        self.name = self.__class__.__name__
        self.weight = weight          # kept for parity; unused in forward (as in PyTorch)
        self.input_fn_name = input_fn
        self.input_fn = FNS[input_fn]
        self.output_fn = FNS[output_fn]
        self.eps = EPS

    def __call__(self, input, target, mask=None, batch_mask=None, *, tile_n=None):
        # glue: last-dim crop (input[..., :target.shape[-1]])
        input = input[..., : target.shape[-1]]
        B, N, D = input.shape

        if mask is None:
            mask = jnp.ones((B, N), dtype=jnp.float32)
        mask3 = jnp.reshape(mask.astype(jnp.float32), (B, N, 1))
        if batch_mask is None:
            batch_mask = jnp.ones((B,), dtype=jnp.float32)
        bmask = jnp.reshape(batch_mask.astype(jnp.float32), (B,))

        if tile_n is None:
            tn = _choose_tile_n(N, D, input.dtype.itemsize, target.dtype.itemsize)
        else:
            tn = min(int(tile_n), N)
        n_tiles = pl.cdiv(N, tn)

        kernel = functools.partial(
            _mse_tile_kernel,
            input_fn=self.input_fn,
            is_linear_input=(self.input_fn_name == "linear"),
            n_tokens=N,
            tile_n=tn,
            needs_row_guard=(N % tn != 0),
        )

        num, den = pl.pallas_call(
            kernel,
            grid=(B, n_tiles),
            in_specs=[
                pl.BlockSpec((1, tn, D), lambda b, n: (b, n, 0)),  # input tile (native dtype)
                pl.BlockSpec((1, tn, D), lambda b, n: (b, n, 0)),  # target tile (native dtype)
                pl.BlockSpec((1, tn, 1), lambda b, n: (b, n, 0)),  # mask tile
            ],
            out_specs=[
                pl.BlockSpec((1, 1, 1), lambda b, n: (b, 0, 0)),   # per-batch numerator
                pl.BlockSpec((1, 1, 1), lambda b, n: (b, 0, 0)),   # per-batch mask count
            ],
            out_shape=[
                jax.ShapeDtypeStruct((B, 1, 1), jnp.float32),
                jax.ShapeDtypeStruct((B, 1, 1), jnp.float32),
            ],
            compiler_params=pltpu.CompilerParams(
                dimension_semantics=("parallel", "arbitrary"),
                vmem_limit_bytes=32 * 1024 * 1024,
            ),
        )(input, target, mask3)

        # Tiny O(B) finalize in plain JAX (keeps the B grid axis parallelizable).
        num = num.reshape(B)
        den = den.reshape(B)
        mean_err = num / jnp.maximum(den, 1.0)                     # per-batch masked mean
        val = self.output_fn(jnp.maximum(mean_err, self.eps))      # clamp(eps) then output_fn
        bsum = jnp.sum(bmask)
        batched = jnp.sum(val * bmask) / jnp.maximum(bsum, 1.0)
        return batched, mean_err


def _mse_reference(inp, tgt, mask, batch_mask, input_fn, output_fn):
    """Pure-JAX reference mirroring the PyTorch forward."""
    inp = inp[..., : tgt.shape[-1]]
    err = input_fn(inp + EPS) - input_fn(tgt + EPS)
    abs_err = jnp.sum(jnp.square(err), axis=-1)                      # (B, N)
    msum = jnp.sum(mask, axis=-1, keepdims=True)
    mean_err = jnp.sum(abs_err * mask, axis=-1, keepdims=True) / jnp.maximum(msum, 1.0)
    mean_err = jnp.mean(mean_err, axis=-1)                           # (B,)
    val = output_fn(jnp.maximum(mean_err, EPS))
    bsum = jnp.sum(batch_mask)
    batched = jnp.sum(val * batch_mask) / jnp.maximum(bsum, 1.0)
    return batched, mean_err


if __name__ == "__main__":
    key = jax.random.PRNGKey(0)
    k1, k2, k3, k4, k5, k6 = jax.random.split(key, 6)

    # --- test 1: small f32 case, single N tile, linear/linear ---
    B, N, D = 2, 64, 32
    inp = jax.random.uniform(k1, (B, N, D), jnp.float32, 0.1, 2.0)
    tgt = jax.random.uniform(k2, (B, N, D), jnp.float32, 0.1, 2.0)
    mask = (jax.random.uniform(k3, (B, N)) > 0.3).astype(jnp.float32)
    batch_mask = jnp.ones((B,), dtype=jnp.float32)

    loss = MSE(weight=1.0, input_fn="linear", output_fn="linear")
    batched, mean_err = loss(inp, tgt, mask=mask, batch_mask=batch_mask)
    jax.block_until_ready((batched, mean_err))

    ref_b, ref_m = _mse_reference(inp, tgt, mask, batch_mask, FNS["linear"], FNS["linear"])
    assert mean_err.shape == (B,)
    assert batched.shape == ()
    assert jnp.allclose(mean_err, ref_m, rtol=1e-5, atol=1e-5), (mean_err, ref_m)
    assert jnp.allclose(batched, ref_b, rtol=1e-5, atol=1e-5), (batched, ref_b)

    # --- test 2: N not divisible by the tile (boundary guard), non-linear fns, batch mask ---
    B2, N2, D2 = 2, 72, 32
    inp2 = jax.random.uniform(k4, (B2, N2, D2), jnp.float32, 0.1, 2.0)
    tgt2 = jax.random.uniform(k5, (B2, N2, D2), jnp.float32, 0.1, 2.0)
    mask2 = (jax.random.uniform(k6, (B2, N2)) > 0.4).astype(jnp.float32)
    bmask2 = jnp.array([1.0, 0.0], dtype=jnp.float32)

    loss2 = MSE(weight=1.0, input_fn="log1", output_fn="sqrt")
    batched2, mean_err2 = loss2(inp2, tgt2, mask=mask2, batch_mask=bmask2, tile_n=32)
    jax.block_until_ready((batched2, mean_err2))

    ref_b2, ref_m2 = _mse_reference(inp2, tgt2, mask2, bmask2, FNS["log1"], FNS["sqrt"])
    assert jnp.allclose(mean_err2, ref_m2, rtol=1e-5, atol=1e-5), (mean_err2, ref_m2)
    assert jnp.allclose(batched2, ref_b2, rtol=1e-5, atol=1e-5), (batched2, ref_b2)

    # --- test 3: bf16 inputs stay bf16 in HBM, f32 compute in-kernel ---
    inp_bf = inp.astype(jnp.bfloat16)
    tgt_bf = tgt.astype(jnp.bfloat16)
    batched3, mean_err3 = loss(inp_bf, tgt_bf, mask=mask, batch_mask=batch_mask)
    jax.block_until_ready((batched3, mean_err3))
    ref_b3, ref_m3 = _mse_reference(inp_bf.astype(jnp.float32), tgt_bf.astype(jnp.float32),
                                    mask, batch_mask, FNS["linear"], FNS["linear"])
    assert jnp.allclose(mean_err3, ref_m3, rtol=1e-5, atol=1e-5), (mean_err3, ref_m3)
    assert jnp.allclose(batched3, ref_b3, rtol=1e-5, atol=1e-5), (batched3, ref_b3)

    print("KERNEL_OK")
</pallas_src>

<mosaic_0001>
module attributes {stable_mosaic.version = 11 : i64} {
  func.func @_mse_tile_kernel(%arg0: i32, %arg1: i32, %arg2: memref<1x64x32xf32, #tpu.memory_space<vmem>>, %arg3: memref<1x64x32xf32, #tpu.memory_space<vmem>>, %arg4: memref<1x64x1xf32, #tpu.memory_space<vmem>>, %arg5: memref<1x1x1xf32, #tpu.memory_space<vmem>>, %arg6: memref<1x1x1xf32, #tpu.memory_space<vmem>>) attributes {dimension_semantics = [#tpu.dimension_semantics<parallel>, #tpu.dimension_semantics<arbitrary>], iteration_bounds = array<i64: 2, 1>, scalar_prefetch = 0 : i64, scratch_operands = 0 : i64, tpu.core_type = #tpu.core_type<tc>, window_params = [{transform_indices = @transform_0, window_bounds = array<i64: 1, 64, 32>}, {transform_indices = @transform_1, window_bounds = array<i64: 1, 64, 32>}, {transform_indices = @transform_2, window_bounds = array<i64: 1, 64, 1>}, {transform_indices = @transform_3, window_bounds = array<i64: 1, 1, 1>}, {transform_indices = @transform_4, window_bounds = array<i64: 1, 1, 1>}]} {
    %c0_i32 = arith.constant 0 : i32
    %0 = arith.cmpi eq, %arg1, %c0_i32 : i32
    %1 = arith.extui %0 : i1 to i32
    %c0_i32_0 = arith.constant 0 : i32
    %2 = arith.cmpi ne, %1, %c0_i32_0 : i32
    scf.if %2 {
      %cst_23 = arith.constant 0.000000e+00 : f32
      %31 = vector.broadcast %cst_23 : f32 to vector<1x1x1xf32>
      %c0_24 = arith.constant 0 : index
      %c0_25 = arith.constant 0 : index
      %c0_26 = arith.constant 0 : index
      %32 = vector.load %arg5[%c0_24, %c0_25, %c0_26] : memref<1x1x1xf32, #tpu.memory_space<vmem>>, vector<1x1x1xf32>
      tpu.vector_store %arg5[%c0_24, %c0_25, %c0_26], %31 {strides = array<i32>} : memref<1x1x1xf32, #tpu.memory_space<vmem>>, vector<1x1x1xf32>,
      %cst_27 = arith.constant 0.000000e+00 : f32
      %33 = vector.broadcast %cst_27 : f32 to vector<1x1x1xf32>
      %c0_28 = arith.constant 0 : index
      %c0_29 = arith.constant 0 : index
      %c0_30 = arith.constant 0 : index
      %34 = vector.load %arg6[%c0_28, %c0_29, %c0_30] : memref<1x1x1xf32, #tpu.memory_space<vmem>>, vector<1x1x1xf32>
      tpu.vector_store %arg6[%c0_28, %c0_29, %c0_30], %33 {strides = array<i32>} : memref<1x1x1xf32, #tpu.memory_space<vmem>>, vector<1x1x1xf32>,
    } else {
    }
    %c0 = arith.constant 0 : index
    %c0_1 = arith.constant 0 : index
    %c0_2 = arith.constant 0 : index
    %3 = vector.load %arg2[%c0, %c0_1, %c0_2] : memref<1x64x32xf32, #tpu.memory_space<vmem>>, vector<1x64x32xf32>
    %4 = vector.shape_cast %3 : vector<1x64x32xf32> to vector<64x32xf32>
    %c0_3 = arith.constant 0 : index
    %c0_4 = arith.constant 0 : index
    %c0_5 = arith.constant 0 : index
    %5 = vector.load %arg3[%c0_3, %c0_4, %c0_5] : memref<1x64x32xf32, #tpu.memory_space<vmem>>, vector<1x64x32xf32>
    %6 = vector.shape_cast %5 : vector<1x64x32xf32> to vector<64x32xf32>
    %7 = arith.subf %4, %6 : vector<64x32xf32>
    %8 = arith.mulf %7, %7 : vector<64x32xf32>
    %c0_6 = arith.constant 0 : index
    %c0_7 = arith.constant 0 : index
    %c0_8 = arith.constant 0 : index
    %9 = vector.load %arg4[%c0_6, %c0_7, %c0_8] : memref<1x64x1xf32, #tpu.memory_space<vmem>>, vector<1x64x1xf32>
    %10 = vector.shape_cast %9 : vector<1x64x1xf32> to vector<64x1xf32>
    %11 = vector.broadcast %10 : vector<64x1xf32> to vector<64x32xf32>
    %12 = arith.mulf %8, %11 : vector<64x32xf32>
    %cst = arith.constant dense<0.000000e+00> : vector<64xf32>
    %13 = vector.multi_reduction <add>, %12, %cst [1] : vector<64x32xf32> to vector<64xf32>
    %14 = vector.shape_cast %13 : vector<64xf32> to vector<64x1xf32>
    %cst_9 = arith.constant dense<0.000000e+00> : vector<1xf32>
    %15 = vector.multi_reduction <add>, %14, %cst_9 [0] : vector<64x1xf32> to vector<1xf32>
    %16 = vector.shape_cast %15 : vector<1xf32> to vector<1x1xf32>
    %cst_10 = arith.constant dense<0.000000e+00> : vector<1xf32>
    %17 = vector.multi_reduction <add>, %10, %cst_10 [0] : vector<64x1xf32> to vector<1xf32>
    %18 = vector.shape_cast %17 : vector<1xf32> to vector<1x1xf32>
    %c0_11 = arith.constant 0 : index
    %c0_12 = arith.constant 0 : index
    %c0_13 = arith.constant 0 : index
    %19 = vector.load %arg5[%c0_11, %c0_12, %c0_13] : memref<1x1x1xf32, #tpu.memory_space<vmem>>, vector<1x1x1xf32>
    %20 = vector.shape_cast %19 : vector<1x1x1xf32> to vector<1x1xf32>
    %21 = arith.addf %20, %16 : vector<1x1xf32>
    %c0_14 = arith.constant 0 : index
    %c0_15 = arith.constant 0 : index
    %c0_16 = arith.constant 0 : index
    %22 = vector.load %arg5[%c0_14, %c0_15, %c0_16] : memref<1x1x1xf32, #tpu.memory_space<vmem>>, vector<1x1x1xf32>
    %23 = vector.shape_cast %22 : vector<1x1x1xf32> to vector<1x1xf32>
    %24 = vector.shape_cast %21 : vector<1x1xf32> to vector<1x1x1xf32>
    tpu.vector_store %arg5[%c0_14, %c0_15, %c0_16], %24 {strides = array<i32>} : memref<1x1x1xf32, #tpu.memory_space<vmem>>, vector<1x1x1xf32>,
    %c0_17 = arith.constant 0 : index
    %c0_18 = arith.constant 0 : index
    %c0_19 = arith.constant 0 : index
    %25 = vector.load %arg6[%c0_17, %c0_18, %c0_19] : memref<1x1x1xf32, #tpu.memory_space<vmem>>, vector<1x1x1xf32>
    %26 = vector.shape_cast %25 : vector<1x1x1xf32> to vector<1x1xf32>
    %27 = arith.addf %26, %18 : vector<1x1xf32>
    %c0_20 = arith.constant 0 : index
    %c0_21 = arith.constant 0 : index
    %c0_22 = arith.constant 0 : index
    %28 = vector.load %arg6[%c0_20, %c0_21, %c0_22] : memref<1x1x1xf32, #tpu.memory_space<vmem>>, vector<1x1x1xf32>
    %29 = vector.shape_cast %28 : vector<1x1x1xf32> to vector<1x1xf32>
    %30 = vector.shape_cast %27 : vector<1x1xf32> to vector<1x1x1xf32>
    tpu.vector_store %arg6[%c0_20, %c0_21, %c0_22], %30 {strides = array<i32>} : memref<1x1x1xf32, #tpu.memory_space<vmem>>, vector<1x1x1xf32>,
    return
  }
  func.func @transform_0(%arg0: i32, %arg1: i32) -> (i32, i32, i32) {
    %c0_i32 = arith.constant 0 : i32
    %c0_i32_0 = arith.constant 0 : i32
    return %arg0, %arg1, %c0_i32 : i32, i32, i32
  }
  func.func @transform_1(%arg0: i32, %arg1: i32) -> (i32, i32, i32) {
    %c0_i32 = arith.constant 0 : i32
    %c0_i32_0 = arith.constant 0 : i32
    return %arg0, %arg1, %c0_i32 : i32, i32, i32
  }
  func.func @transform_2(%arg0: i32, %arg1: i32) -> (i32, i32, i32) {
    %c0_i32 = arith.constant 0 : i32
    %c0_i32_0 = arith.constant 0 : i32
    return %arg0, %arg1, %c0_i32 : i32, i32, i32
  }
  func.func @transform_3(%arg0: i32, %arg1: i32) -> (i32, i32, i32) {
    %c0_i32 = arith.constant 0 : i32
    %c0_i32_0 = arith.constant 0 : i32
    %c0_i32_1 = arith.constant 0 : i32
    return %arg0, %c0_i32, %c0_i32_0 : i32, i32, i32
  }
  func.func @transform_4(%arg0: i32, %arg1: i32) -> (i32, i32, i32) {
    %c0_i32 = arith.constant 0 : i32
    %c0_i32_0 = arith.constant 0 : i32
    %c0_i32_1 = arith.constant 0 : i32
    return %arg0, %c0_i32, %c0_i32_0 : i32, i32, i32
  }
}

</mosaic_0001>

<llo_original>
// kernel: tpu_custom_call.1
$region0: #{tpu_custom_call.1}
  #allocation0 [shape = 'u32[]', space=smem, size = 0x4, offset = 0x4, fixed_abs, tag = 'smem constant byte address 0x4 - core index']
  #allocation1 [shape = 'u32[72,128]{1,0:T(1,128)}', space=vmem, size = 0x9000, scoped, tag = 'internal scratch']
  %s0 = inlined_call_operand.vmem [shape: f32[2,64,32], index: 0, kind: input, shape index: {}]
  %s1 = inlined_call_operand.vmem [shape: f32[2,64,32], index: 1, kind: input, shape index: {}]
  %s2 = inlined_call_operand.vmem [shape: f32[2,64,1], index: 2, kind: input, shape index: {}]
  %s3 = inlined_call_operand.vmem [shape: f32[2,1,1], index: 3, kind: output, shape index: {0}]
  %s4 = inlined_call_operand.vmem [shape: f32[2,1,1], index: 4, kind: output, shape index: {1}]
  %5 = xla_tuple %s3, %s4
  %s6 = sld [smem:[#allocation0]]
  $region57: #{tpu_custom_call.1} parent=0
    _
  %s8 = ssub.s32 1, %s6
  %s9 = scalar_select 0, %s8, %s6
  loop: start=0, step=1, limit=4
  $region2: #{tpu_custom_call.1} parent=0 // loop_pre_header
    _
  $region3: #{tpu_custom_call.1} parent=0 // loop_header
    %s11 = sphi 0, %s15
    %p12 = scmp.ge.s32.totalorder %s11, 4
    %s18 = sphi 0, %s30
    %s19 = sphi 0, %s26
    %s20 = sphi 0, %s18
    %s21 = sphi 0, %s19
    %s22 = sphi 0, %s20
    %s23 = sphi 0, %s21
    %s35 = sphi 0, %s37
    %s38 = sphi 0, %s35
    %s39 = sphi 0, %s38
    %s55 = sphi 0, %s39
    %s63 = sphi 0, %s65
    %s66 = sphi 0, %s63
    %s67 = sphi 0, %s66
    %s83 = sphi 0, %s67
    %s91 = sphi 0, %s93
    %s94 = sphi 0, %s91
    %s95 = sphi 0, %s94
    %s111 = sphi 0, %s95
    %s117 = sphi 0, %s119
    %s120 = sphi 0, %s117
    %s121 = sphi 0, %s120
    %s137 = sphi 0, %s121
    %s143 = sphi 0, %s145
    %s146 = sphi 0, %s143
    %s147 = sphi 0, %s146
    %s163 = sphi 0, %s147
  $region4: #{tpu_custom_call.1} parent=0 // loop_header_branch
    %14 = sbr.rel (%p12) target = $region8
  $region5: #{tpu_custom_call.1} parent=0 // loop_body
    %s16 = ssub.s32 %s11, 1
    %s17 = ssub.s32 %s11, 2
    %s24 = sadd.s32 1, %s19
    %p25 = scmp.ge.s32.totalorder %s24, 1
    %s26 = scalar_select %p25, 0, %s24
    %s27 = sadd.s32 1, %s18
    %s28 = scalar_select %p25, %s27, %s18
    %p29 = scmp.ge.s32.totalorder %s28, 2
    %s30 = scalar_select %p29, 0, %s28
    %s31 = ssub.s32 %s18, %s30
    %s32 = ssub.s32 %s19, %s26
    %s33 = sor.u32 %s31, %s32
    %p34 = scmp.eq.s32.totalorder %s33, 0
    %s36 = sadd.s32 %s35, 1
    %s37 = scalar_select %p34, %s35, %s36
    %p40 = pneg %p34
    %p41 = scmp.eq.s32.totalorder %s11, 1
    %p42 = por %p40, %p41
    %p43 = scmp.ne.s32.totalorder %s35, %s38
    %p44 = scmp.eq.s32.totalorder %s11, 0
    %p45 = por %p43, %p44
    %p46 = scmp.ne.s32.totalorder %s35, %s38
    %p47 = scmp.eq.s32.totalorder %s16, 1
    %p48 = por %p46, %p47
    %p49 = scmp.ne.s32.totalorder %s38, %s39
    %p50 = scmp.eq.s32.totalorder %s16, 0
    %p51 = por %p49, %p50
    %p52 = scmp.ne.s32.totalorder %s38, %s39
    %p53 = scmp.eq.s32.totalorder %s17, 1
    %p54 = por %p52, %p53
    %p56 = scmp.ne.s32.totalorder %s39, %s55
    %p57 = scmp.eq.s32.totalorder %s17, 0
    %p58 = por %p56, %p57
    %s59 = ssub.s32 %s18, %s30
    %s60 = ssub.s32 %s19, %s26
    %s61 = sor.u32 %s59, %s60
    %p62 = scmp.eq.s32.totalorder %s61, 0
    %s64 = sadd.s32 %s63, 1
    %s65 = scalar_select %p62, %s63, %s64
    %p68 = pneg %p62
    %p69 = scmp.eq.s32.totalorder %s11, 1
    %p70 = por %p68, %p69
    %p71 = scmp.ne.s32.totalorder %s63, %s66
    %p72 = scmp.eq.s32.totalorder %s11, 0
    %p73 = por %p71, %p72
    %p74 = scmp.ne.s32.totalorder %s63, %s66
    %p75 = scmp.eq.s32.totalorder %s16, 1
    %p76 = por %p74, %p75
    %p77 = scmp.ne.s32.totalorder %s66, %s67
    %p78 = scmp.eq.s32.totalorder %s16, 0
    %p79 = por %p77, %p78
    %p80 = scmp.ne.s32.totalorder %s66, %s67
    %p81 = scmp.eq.s32.totalorder %s17, 1
    %p82 = por %p80, %p81
    %p84 = scmp.ne.s32.totalorder %s67, %s83
    %p85 = scmp.eq.s32.totalorder %s17, 0
    %p86 = por %p84, %p85
    %s87 = ssub.s32 %s18, %s30
    %s88 = ssub.s32 %s19, %s26
    %s89 = sor.u32 %s87, %s88
    %p90 = scmp.eq.s32.totalorder %s89, 0
    %s92 = sadd.s32 %s91, 1
    %s93 = scalar_select %p90, %s91, %s92
    %p96 = pneg %p90
    %p97 = scmp.eq.s32.totalorder %s11, 1
    %p98 = por %p96, %p97
    %p99 = scmp.ne.s32.totalorder %s91, %s94
    %p100 = scmp.eq.s32.totalorder %s11, 0
    %p101 = por %p99, %p100
    %p102 = scmp.ne.s32.totalorder %s91, %s94
    %p103 = scmp.eq.s32.totalorder %s16, 1
    %p104 = por %p102, %p103
    %p105 = scmp.ne.s32.totalorder %s94, %s95
    %p106 = scmp.eq.s32.totalorder %s16, 0
    %p107 = por %p105, %p106
    %p108 = scmp.ne.s32.totalorder %s94, %s95
    %p109 = scmp.eq.s32.totalorder %s17, 1
    %p110 = por %p108, %p109
    %p112 = scmp.ne.s32.totalorder %s95, %s111
    %p113 = scmp.eq.s32.totalorder %s17, 0
    %p114 = por %p112, %p113
    %s115 = ssub.s32 %s18, %s30
    %p116 = scmp.eq.s32.totalorder %s115, 0
    %s118 = sadd.s32 %s117, 1
    %s119 = scalar_select %p116, %s117, %s118
    %p122 = pneg %p116
    %p123 = scmp.eq.s32.totalorder %s11, 1
    %p124 = por %p122, %p123
    %p125 = scmp.ne.s32.totalorder %s117, %s120
    %p126 = scmp.eq.s32.totalorder %s11, 0
    %p127 = por %p125, %p126
    %p128 = scmp.ne.s32.totalorder %s117, %s120
    %p129 = scmp.eq.s32.totalorder %s16, 1
    %p130 = por %p128, %p129
    %p131 = scmp.ne.s32.totalorder %s120, %s121
    %p132 = scmp.eq.s32.totalorder %s16, 0
    %p133 = por %p131, %p132
    %p134 = scmp.ne.s32.totalorder %s120, %s121
    %p135 = scmp.eq.s32.totalorder %s17, 1
    %p136 = por %p134, %p135
    %p138 = scmp.ne.s32.totalorder %s121, %s137
    %p139 = scmp.eq.s32.totalorder %s17, 0
    %p140 = por %p138, %p139
    %s141 = ssub.s32 %s18, %s30
    %p142 = scmp.eq.s32.totalorder %s141, 0
    %s144 = sadd.s32 %s143, 1
    %s145 = scalar_select %p142, %s143, %s144
    %p148 = pneg %p142
    %p149 = scmp.eq.s32.totalorder %s11, 1
    %p150 = por %p148, %p149
    %p151 = scmp.ne.s32.totalorder %s143, %s146
    %p152 = scmp.eq.s32.totalorder %s11, 0
    %p153 = por %p151, %p152
    %p154 = scmp.ne.s32.totalorder %s143, %s146
    %p155 = scmp.eq.s32.totalorder %s16, 1
    %p156 = por %p154, %p155
    %p157 = scmp.ne.s32.totalorder %s146, %s147
    %p158 = scmp.eq.s32.totalorder %s16, 0
    %p159 = por %p157, %p158
    %p160 = scmp.ne.s32.totalorder %s146, %s147
    %p161 = scmp.eq.s32.totalorder %s17, 1
    %p162 = por %p160, %p161
    %p164 = scmp.ne.s32.totalorder %s147, %s163
    %p165 = scmp.eq.s32.totalorder %s17, 0
    %p166 = por %p164, %p165
    %p167 = scmp.le.s32.totalorder 1, %s11
    %p168 = scmp.lt.s32.totalorder %s11, 3
    %p169 = pnand %p167, %p168
    %p170 = pneg %p169
    // Predicated region
    $region9: #{tpu_custom_call.1} parent=5 // pred_check
      _
    $region10: #{tpu_custom_call.1} parent=5 // pred_check_branch
      %172 = sbr.rel (%p169) target = $region12
    $region11: #{tpu_custom_call.1} parent=5 // pred_region
      %s173 = ssub.s32 %s11, 1
    $region12: #{tpu_custom_call.1} parent=5 // pred_fallthru
      _
    %p174 = scmp.lt.s32.totalorder %s11, 2
    // Predicated region
    $region13: #{tpu_custom_call.1} parent=5 // pred_check
      %p175 = pneg %p174
    $region14: #{tpu_custom_call.1} parent=5 // pred_check_branch
      %177 = sbr.rel (%p175) target = $region16
    $region15: #{tpu_custom_call.1} parent=5 // pred_region
      // Predicated region
      $region17: #{tpu_custom_call.1} parent=15 // pred_check
        %p178 = pneg %p45
      $region18: #{tpu_custom_call.1} parent=15 // pred_check_branch
        %180 = sbr.rel (%p178) target = $region20
      $region19: #{tpu_custom_call.1} parent=15 // pred_region
        %s181 = smul.u32 8, %s19
        %p182 = scmp.lt.s32.totalorder %s18, 1
        %s183 = scalar_select %p182, %s18, 1
        %p184 = scmp.lt.s32.totalorder %s181, 7
        %s185 = scalar_select %p184, %s181, 7
        %s186 = smul.addr %s183, 8
        %s187 = sadd.s32 %s185, %s186
        %s188 = smul.addr %s187, 8
        %s189 = scalar_lea.vmem %s0, %s188
        %s190 = smul.u32 8, %s19
      $region20: #{tpu_custom_call.1} parent=15 // pred_fallthru
        _
      // Predicated region
      $region21: #{tpu_custom_call.1} parent=15 // pred_check
        %p191 = pneg %p73
      $region22: #{tpu_custom_call.1} parent=15 // pred_check_branch
        %193 = sbr.rel (%p191) target = $region24
      $region23: #{tpu_custom_call.1} parent=15 // pred_region
        %s194 = smul.u32 8, %s19
        %p195 = scmp.lt.s32.totalorder %s18, 1
        %s196 = scalar_select %p195, %s18, 1
        %p197 = scmp.lt.s32.totalorder %s194, 7
        %s198 = scalar_select %p197, %s194, 7
        %s199 = smul.addr %s196, 8
        %s200 = sadd.s32 %s198, %s199
        %s201 = smul.addr %s200, 8
        %s202 = scalar_lea.vmem %s1, %s201
        %s203 = smul.u32 8, %s19
      $region24: #{tpu_custom_call.1} parent=15 // pred_fallthru
        _
      // Predicated region
      $region25: #{tpu_custom_call.1} parent=15 // pred_check
        %p204 = pneg %p101
      $region26: #{tpu_custom_call.1} parent=15 // pred_check_branch
        %206 = sbr.rel (%p204) target = $region28
      $region27: #{tpu_custom_call.1} parent=15 // pred_region
        %s207 = smul.u32 8, %s19
        %p208 = scmp.lt.s32.totalorder %s18, 1
        %s209 = scalar_select %p208, %s18, 1
        %p210 = scmp.lt.s32.totalorder %s207, 7
        %s211 = scalar_select %p210, %s207, 7
        %s212 = smul.addr %s209, 8
        %s213 = sadd.s32 %s211, %s212
        %s214 = smul.addr %s213, 8
        %s215 = scalar_lea.vmem %s2, %s214
        %s216 = smul.u32 8, %s19
      $region28: #{tpu_custom_call.1} parent=15 // pred_fallthru
        _
    $region16: #{tpu_custom_call.1} parent=5 // pred_fallthru
      _
    %p217 = scmp.le.s32.totalorder 1, %s11
    %p218 = scmp.lt.s32.totalorder %s11, 3
    %p219 = pnand %p217, %p218
    %p220 = pneg %p219
    // Predicated region
    $region29: #{tpu_custom_call.1} parent=5 // pred_check
      _
    $region30: #{tpu_custom_call.1} parent=5 // pred_check_branch
      %222 = sbr.rel (%p219) target = $region32
    $region31: #{tpu_custom_call.1} parent=5 // pred_region
      %s223 = ssub.s32 %s11, 1
      %s224 = smul.u32 8, %s21
      %p225 = scmp.lt.s32.totalorder %s20, 1
      %s226 = scalar_select %p225, %s20, 1
      %p227 = scmp.lt.s32.totalorder %s224, 7
      %s228 = scalar_select %p227, %s224, 7
      %s229 = smul.addr %s226, 8
      %s230 = sadd.s32 %s228, %s229
      %s231 = smul.addr %s230, 8
      %s232 = scalar_lea.vmem %s0, %s231
      %p233 = pneg %p51
      %p234 = pneg %p48
      %s235 = smul.u32 8, %s21
      %p236 = scmp.lt.s32.totalorder %s20, 1
      %s237 = scalar_select %p236, %s20, 1
      %p238 = scmp.lt.s32.totalorder %s235, 7
      %s239 = scalar_select %p238, %s235, 7
      %s240 = smul.addr %s237, 8
      %s241 = sadd.s32 %s239, %s240
      %s242 = smul.addr %s241, 8
      %s243 = scalar_lea.vmem %s1, %s242
      %p244 = pneg %p79
      %p245 = pneg %p76
      %s246 = smul.u32 8, %s21
      %p247 = scmp.lt.s32.totalorder %s20, 1
      %s248 = scalar_select %p247, %s20, 1
      %p249 = scmp.lt.s32.totalorder %s246, 7
      %s250 = scalar_select %p249, %s246, 7
      %s251 = smul.addr %s248, 8
      %s252 = sadd.s32 %s250, %s251
      %s253 = smul.addr %s252, 8
      %s254 = scalar_lea.vmem %s2, %s253
      %p255 = pneg %p107
      %p256 = pneg %p104
      %p257 = pneg %p133
      %p258 = pneg %p130
      %p259 = scmp.lt.s32.totalorder %s20, 1
      %s260 = scalar_select %p259, %s20, 1
      %s261 = scalar_lea.vmem %s3, %s260
      %p262 = pneg %p159
      %p263 = pneg %p156
      %p264 = scmp.lt.s32.totalorder %s20, 1
      %s265 = scalar_select %p264, %s20, 1
      %s266 = scalar_lea.vmem %s4, %s265
      %s267 = smul.u32 8, %s21
      %p268 = scmp.lt.s32.totalorder %s20, 1
      %s269 = scalar_select %p268, %s20, 1
      %p270 = scmp.lt.s32.totalorder %s267, 7
      %s271 = scalar_select %p270, %s267, 7
      %s272 = smul.addr %s269, 8
      %s273 = sadd.s32 %s271, %s272
      %s274 = smul.addr %s273, 8
      %s275 = scalar_lea.vmem %s0, %s274
      %s276 = smul.u32 8, %s21
      %s277 = smul.u32 8, %s21
      %p278 = scmp.lt.s32.totalorder %s20, 1
      %s279 = scalar_select %p278, %s20, 1
      %p280 = scmp.lt.s32.totalorder %s277, 7
      %s281 = scalar_select %p280, %s277, 7
      %s282 = smul.addr %s279, 8
      %s283 = sadd.s32 %s281, %s282
      %s284 = smul.addr %s283, 8
      %s285 = scalar_lea.vmem %s1, %s284
      %s286 = smul.u32 8, %s21
      %s287 = smul.u32 8, %s21
      %p288 = scmp.lt.s32.totalorder %s20, 1
      %s289 = scalar_select %p288, %s20, 1
      %p290 = scmp.lt.s32.totalorder %s287, 7
      %s291 = scalar_select %p290, %s287, 7
      %s292 = smul.addr %s289, 8
      %s293 = sadd.s32 %s291, %s292
      %s294 = smul.addr %s293, 8
      %s295 = scalar_lea.vmem %s2, %s294
      %s296 = smul.u32 8, %s21
      %p297 = scmp.lt.s32.totalorder %s20, 1
      %s298 = scalar_select %p297, %s20, 1
      %s299 = scalar_lea.vmem %s3, %s298
      %p300 = scmp.lt.s32.totalorder %s20, 1
      %s301 = scalar_select %p300, %s20, 1
      %s302 = scalar_lea.vmem %s4, %s301
      %p303 = scmp.eq.s32.totalorder %s21, 0
      // Predicated region
      $region33: #{tpu_custom_call.1} parent=31 // pred_check
        %p304 = pneg %p303
      $region34: #{tpu_custom_call.1} parent=31 // pred_check_branch
        %306 = sbr.rel (%p304) target = $region36
      $region35: #{tpu_custom_call.1} parent=31 // pred_region
        %vm307 = vcmask 0
        %308 = vst.msk [vmem:[%s299] sm:$0x1] %vm307, 0.0
        %309 = vst.msk [vmem:[%s302] sm:$0x1] %vm307, 0.0
      $region36: #{tpu_custom_call.1} parent=31 // pred_fallthru
        _
      %v310 = vld [vmem:[%s275] sm:$0xff]
      %v311 = vld [vmem:[%s275 + $0x8] sm:$0xff]
      %v312 = vld [vmem:[%s275 + $0x10] sm:$0xff]
      %v313 = vld [vmem:[%s275 + $0x18] sm:$0xff]
      %v314 = vld [vmem:[%s275 + $0x20] sm:$0xff]
      %v315 = vld [vmem:[%s275 + $0x28] sm:$0xff]
      %v316 = vld [vmem:[%s275 + $0x30] sm:$0xff]
      %v317 = vld [vmem:[%s275 + $0x38] sm:$0xff]
      %v318 = vld [vmem:[%s285] sm:$0xff]
      %v319 = vld [vmem:[%s285 + $0x8] sm:$0xff]
      %v320 = vld [vmem:[%s285 + $0x10] sm:$0xff]
      %v321 = vld [vmem:[%s285 + $0x18] sm:$0xff]
      %v322 = vld [vmem:[%s285 + $0x20] sm:$0xff]
      %v323 = vld [vmem:[%s285 + $0x28] sm:$0xff]
      %v324 = vld [vmem:[%s285 + $0x30] sm:$0xff]
      %v325 = vld [vmem:[%s285 + $0x38] sm:$0xff]
      %v326 = vsub.f32 %v310, %v318
      %v327 = vsub.f32 %v311, %v319
      %v328 = vsub.f32 %v312, %v320
      %v329 = vsub.f32 %v313, %v321
      %v330 = vsub.f32 %v314, %v322
      %v331 = vsub.f32 %v315, %v323
      %v332 = vsub.f32 %v316, %v324
      %v333 = vsub.f32 %v317, %v325
      %v334 = vmul.f32 %v326, %v326
      %v335 = vmul.f32 %v327, %v327
      %v336 = vmul.f32 %v328, %v328
      %v337 = vmul.f32 %v329, %v329
      %v338 = vmul.f32 %v330, %v330
      %v339 = vmul.f32 %v331, %v331
      %v340 = vmul.f32 %v332, %v332
      %v341 = vmul.f32 %v333, %v333
      %v342 = vld [vmem:[%s295] sm:$0xff]
      %v343 = vld [vmem:[%s295 + $0x8] sm:$0xff]
      %v344 = vld [vmem:[%s295 + $0x10] sm:$0xff]
      %v345 = vld [vmem:[%s295 + $0x18] sm:$0xff]
      %v346 = vld [vmem:[%s295 + $0x20] sm:$0xff]
      %v347 = vld [vmem:[%s295 + $0x28] sm:$0xff]
      %v348 = vld [vmem:[%s295 + $0x30] sm:$0xff]
      %v349 = vld [vmem:[%s295 + $0x38] sm:$0xff]
      %351 = vset.pattern.permute.xlu0 0
      %352 = vperm.xlu0 %351, %v342
      %v353 = vpop.permute.xlu0 %352
      %356 = vset.pattern.permute.xlu0 0
      %357 = vperm.xlu0 %356, %v343
      %v358 = vpop.permute.xlu0 %357
      %361 = vset.pattern.permute.xlu0 0
      %362 = vperm.xlu0 %361, %v344
      %v363 = vpop.permute.xlu0 %362
      %366 = vset.pattern.permute.xlu0 0
      %367 = vperm.xlu0 %366, %v345
      %v368 = vpop.permute.xlu0 %367
      %371 = vset.pattern.permute.xlu0 0
      %372 = vperm.xlu0 %371, %v346
      %v373 = vpop.permute.xlu0 %372
      %376 = vset.pattern.permute.xlu0 0
      %377 = vperm.xlu0 %376, %v347
      %v378 = vpop.permute.xlu0 %377
      %381 = vset.pattern.permute.xlu0 0
      %382 = vperm.xlu0 %381, %v348
      %v383 = vpop.permute.xlu0 %382
      %386 = vset.pattern.permute.xlu0 0
      %387 = vperm.xlu0 %386, %v349
      %v388 = vpop.permute.xlu0 %387
      %v390 = vmul.f32 %v334, %v353
      %v391 = vmul.f32 %v335, %v358
      %v392 = vmul.f32 %v336, %v363
      %v393 = vmul.f32 %v337, %v368
      %v394 = vmul.f32 %v338, %v373
      %v395 = vmul.f32 %v339, %v378
      %v396 = vmul.f32 %v340, %v383
      %v397 = vmul.f32 %v341, %v388
      %vm398 = vcmask 261120
      %v399 = vsel %vm398, %v390, 0.0
      %400 = vadd.xlane.f32.xlu0 %v399
      %v401 = vpop.xlane.xlu0 %400
      %v402 = vsel %vm398, %v391, 0.0
      %403 = vadd.xlane.f32.xlu0 %v402
      %v404 = vpop.xlane.xlu0 %403
      %v405 = vsel %vm398, %v392, 0.0
      %406 = vadd.xlane.f32.xlu0 %v405
      %v407 = vpop.xlane.xlu0 %406
      %v408 = vsel %vm398, %v393, 0.0
      %409 = vadd.xlane.f32.xlu0 %v408
      %v410 = vpop.xlane.xlu0 %409
      %v411 = vsel %vm398, %v394, 0.0
      %412 = vadd.xlane.f32.xlu0 %v411
      %v413 = vpop.xlane.xlu0 %412
      %v414 = vsel %vm398, %v395, 0.0
      %415 = vadd.xlane.f32.xlu0 %v414
      %v416 = vpop.xlane.xlu0 %415
      %v417 = vsel %vm398, %v396, 0.0
      %418 = vadd.xlane.f32.xlu0 %v417
      %v419 = vpop.xlane.xlu0 %418
      %v420 = vsel %vm398, %v397, 0.0
      %421 = vadd.xlane.f32.xlu0 %v420
      %v422 = vpop.xlane.xlu0 %421
      %v423 = vadd.f32 %v401, %v404
      %v424 = vadd.f32 %v423, %v407
      %v425 = vadd.f32 %v424, %v410
      %v426 = vadd.f32 %v425, %v413
      %v427 = vadd.f32 %v426, %v416
      %v428 = vadd.f32 %v427, %v419
      %v429 = vadd.f32 %v428, %v422
      %v430 = vrot.slane %v429, 4
      %v431 = vadd.f32 %v429, %v430
      %v432 = vrot.slane %v431, 2
      %v433 = vadd.f32 %v431, %v432
      %v434 = vrot.slane %v433, 1
      %v435 = vadd.f32 %v433, %v434
      %vm436 = vcmask 7168
      %v437 = vsel %vm436, %v342, 0.0
      %v438 = vsel %vm436, %v343, 0.0
      %v439 = vadd.f32 %v437, %v438
      %v440 = vsel %vm436, %v344, 0.0
      %v441 = vadd.f32 %v439, %v440
      %v442 = vsel %vm436, %v345, 0.0
      %v443 = vadd.f32 %v441, %v442
      %v444 = vsel %vm436, %v346, 0.0
      %v445 = vadd.f32 %v443, %v444
      %v446 = vsel %vm436, %v347, 0.0
      %v447 = vadd.f32 %v445, %v446
      %v448 = vsel %vm436, %v348, 0.0
      %v449 = vadd.f32 %v447, %v448
      %v450 = vsel %vm436, %v349, 0.0
      %v451 = vadd.f32 %v449, %v450
      %v452 = vrot.slane %v451, 4
      %v453 = vadd.f32 %v451, %v452
      %v454 = vrot.slane %v453, 2
      %v455 = vadd.f32 %v453, %v454
      %v456 = vrot.slane %v455, 1
      %v457 = vadd.f32 %v455, %v456
      %v458 = vld [vmem:[%s299] sm:$0x1]
      %v459 = vadd.f32 %v458, %v435
      %vm460 = vcmask 0
      %461 = vst.msk [vmem:[%s299] sm:$0x1] %vm460, %v459
      %v462 = vld [vmem:[%s302] sm:$0x1]
      %v463 = vadd.f32 %v462, %v457
      %464 = vst.msk [vmem:[%s302] sm:$0x1] %vm460, %v463
      %p465 = scmp.lt.s32.totalorder %s20, 1
      %s466 = scalar_select %p465, %s20, 1
      %s467 = scalar_lea.vmem %s3, %s466
      %p468 = scmp.lt.s32.totalorder %s20, 1
      %s469 = scalar_select %p468, %s20, 1
      %s470 = scalar_lea.vmem %s4, %s469
      // Predicated region
      $region37: #{tpu_custom_call.1} parent=31 // pred_check
        %p471 = pneg %p130
      $region38: #{tpu_custom_call.1} parent=31 // pred_check_branch
        %473 = sbr.rel (%p471) target = $region40
      $region39: #{tpu_custom_call.1} parent=31 // pred_region
        _
      $region40: #{tpu_custom_call.1} parent=31 // pred_fallthru
        _
      // Predicated region
      $region41: #{tpu_custom_call.1} parent=31 // pred_check
        %p474 = pneg %p156
      $region42: #{tpu_custom_call.1} parent=31 // pred_check_branch
        %476 = sbr.rel (%p474) target = $region44
      $region43: #{tpu_custom_call.1} parent=31 // pred_region
        _
      $region44: #{tpu_custom_call.1} parent=31 // pred_fallthru
        _
    $region32: #{tpu_custom_call.1} parent=5 // pred_fallthru
      _
    %p477 = scmp.le.s32.totalorder 2, %s11
    // Predicated region
    $region45: #{tpu_custom_call.1} parent=5 // pred_check
      %p478 = pneg %p477
    $region46: #{tpu_custom_call.1} parent=5 // pred_check_branch
      %480 = sbr.rel (%p478) target = $region48
    $region47: #{tpu_custom_call.1} parent=5 // pred_region
      %s481 = ssub.s32 %s11, 2
      // Predicated region
      $region49: #{tpu_custom_call.1} parent=47 // pred_check
        %p482 = pneg %p136
      $region50: #{tpu_custom_call.1} parent=47 // pred_check_branch
        %484 = sbr.rel (%p482) target = $region52
      $region51: #{tpu_custom_call.1} parent=47 // pred_region
        %p485 = scmp.lt.s32.totalorder %s22, 1
        %s486 = scalar_select %p485, %s22, 1
        %s487 = scalar_lea.vmem %s3, %s486
      $region52: #{tpu_custom_call.1} parent=47 // pred_fallthru
        _
      // Predicated region
      $region53: #{tpu_custom_call.1} parent=47 // pred_check
        %p488 = pneg %p162
      $region54: #{tpu_custom_call.1} parent=47 // pred_check_branch
        %490 = sbr.rel (%p488) target = $region56
      $region55: #{tpu_custom_call.1} parent=47 // pred_region
        %p491 = scmp.lt.s32.totalorder %s22, 1
        %s492 = scalar_select %p491, %s22, 1
        %s493 = scalar_lea.vmem %s4, %s492
      $region56: #{tpu_custom_call.1} parent=47 // pred_fallthru
        _
    $region48: #{tpu_custom_call.1} parent=5 // pred_fallthru
      _
  $region6: #{tpu_custom_call.1} parent=0 // loop_footer
    %s15 = sadd.s32 1, %s11
  $region7: #{tpu_custom_call.1} parent=0 // loop_footer_branch
    %10 = sbr.rel target = $region3
  $region8: #{tpu_custom_call.1} parent=0 // loop_exit
    _

</llo_original>
